<compile_context>
chip_gen: v7x
topology: tpu7x:2x2x1
jax: 0.10.0
libtpu: 0.0.40
codegen_flags: <defaults>
</compile_context>

<pallas_src>
import functools

import jax
import jax.numpy as jnp
from jax.experimental import pallas as pl
from jax.experimental.pallas import tpu as pltpu

FREQ = 160          # frequency_feature_size
TIME = 224          # time_feature_size
REST = 16           # trailing features passed as third backbone input
D_TOTAL = FREQ + TIME + REST          # 400
HIDDEN = 2 ** 6                       # hidden_size = 64
NCLASS = 2
HPAD = 128                            # lane-dense padded width for outputs


def danet_kernel(src_ref, tgt_ref, wb_ref, bb_ref, wh_ref, out_ref, *, rows):
    wb = wb_ref[...]          # (400, 128)  backbone weights (cols >= 64 zero)
    bb = bb_ref[...]          # (1, 128)    backbone bias    (cols >= 64 zero)
    wh = wh_ref[...]          # (128, 128)  signed-difference head weights
                              #   cols 64/65 = +/-(wc0-wc1), 66/67 = +/-(wd0-wd1)
                              #   row 64 holds the (signed) head bias differences

    def branch(x):
        # Backbone: fused K=400 matmul + bias + ReLU.
        h = jnp.dot(x, wb, preferred_element_type=jnp.float32) + bb
        fea = jnp.maximum(h, 0.0)                       # (rows, 128), cols>=64 zero

        lane = jax.lax.broadcasted_iota(jnp.int32, fea.shape, 1)
        # Ones-lane at column 64 activates the bias row of the head weights.
        fea1 = jnp.where(lane == HIDDEN, 1.0, fea)

        # Head: single matmul producing per-lane "difference logits".
        diff = jnp.dot(fea1, wh, preferred_element_type=jnp.float32)

        # 2-class log-softmax closed form: min(d,0) - log1p(exp(-|d|)).
        # Padded lanes (diff == 0) yield -log(2); sliced away / overwritten.
        logp = jnp.minimum(diff, 0.0) - jnp.log1p(jnp.exp(-jnp.abs(diff)))

        # Fused output slab: lanes 0..63 = features, 64..67 = head log-probs.
        return jnp.where(lane < HIDDEN, fea, logp)

    out_ref[0:rows, :] = branch(src_ref[...])
    out_ref[rows:2 * rows, :] = branch(tgt_ref[...])


def _full_spec(shape):
    nd = len(shape)
    return pl.BlockSpec(shape, lambda i: (0,) * nd)


def fuse_params(params):
    """One-time (init-time) fusion of PyTorch-style weights into lane-dense slabs."""
    wf, wt, wr, bb, wc, bc, wd, bd = params
    # Backbone: one K=400 weight slab, zero-padded to 128 output lanes.
    wb = jnp.concatenate([wf, wt, wr], axis=0)                   # (400, 64)
    wb = jnp.pad(wb, ((0, 0), (0, HPAD - HIDDEN)))               # (400, 128)
    bbp = jnp.pad(bb, ((0, 0), (0, HPAD - HIDDEN)))              # (1, 128)
    # Head: signed-difference columns so the kernel computes a-b directly.
    dc = wc[:, 0] - wc[:, 1]                                     # (64,)
    dd = wd[:, 0] - wd[:, 1]                                     # (64,)
    dbc = bc[0, 0] - bc[0, 1]
    dbd = bd[0, 0] - bd[0, 1]
    col_c = jnp.concatenate([dc, jnp.array([dbc], jnp.float32)])  # (65,)
    col_d = jnp.concatenate([dd, jnp.array([dbd], jnp.float32)])  # (65,)
    head = jnp.stack([col_c, -col_c, col_d, -col_d], axis=1)      # (65, 4)
    wh = jnp.zeros((HPAD, HPAD), jnp.float32)
    wh = wh.at[:HIDDEN + 1, HIDDEN:HIDDEN + 2 * NCLASS].set(head)  # rows 0..64
    return wb, bbp, wh


@jax.jit
def danet_forward(source_data, target_data, wb, bb, wh):
    B = source_data.shape[0]
    pad = (-B) % 8
    if pad:
        source_data = jnp.pad(source_data, ((0, pad), (0, 0)))
        target_data = jnp.pad(target_data, ((0, pad), (0, 0)))
    Bp = B + pad

    out = pl.pallas_call(
        functools.partial(danet_kernel, rows=Bp),
        out_shape=jax.ShapeDtypeStruct((2 * Bp, HPAD), jnp.float32),
        grid_spec=pltpu.PrefetchScalarGridSpec(
            num_scalar_prefetch=0,
            grid=(1,),                          # whole batch, single grid step
            in_specs=[
                _full_spec((Bp, D_TOTAL)),      # source
                _full_spec((Bp, D_TOTAL)),      # target
                _full_spec(wb.shape),
                _full_spec(bb.shape),
                _full_spec(wh.shape),
            ],
            out_specs=_full_spec((2 * Bp, HPAD)),
        ),
        compiler_params=pltpu.CompilerParams(
            dimension_semantics=("arbitrary",)),   # never shard a 1-step grid
    )(source_data, target_data, wb, bb, wh)

    source_feature = out[:B, :HIDDEN]            # s_fea.view(B, -1): already 2-D
    target_feature = out[Bp:Bp + B, :HIDDEN]
    s_clf = out[:B, HIDDEN:HIDDEN + NCLASS]
    t_clf = out[Bp:Bp + B, HIDDEN:HIDDEN + NCLASS]
    s_out = out[:B, HIDDEN + NCLASS:HIDDEN + 2 * NCLASS]
    t_out = out[Bp:Bp + B, HIDDEN + NCLASS:HIDDEN + 2 * NCLASS]
    return source_feature, target_feature, s_clf, t_clf, s_out, t_out


def _reference(data, params):
    """Plain-JAX reference (unfused weights) for correctness checking."""
    wf, wt, wr, bb, wc, bc, wd, bd = params
    freq = data[:, :FREQ]
    time = data[:, FREQ:FREQ + TIME]
    rest = data[:, FREQ + TIME:]
    fea = jnp.maximum(freq @ wf + time @ wt + rest @ wr + bb, 0.0)
    ls = jax.nn.log_softmax
    return fea, ls(fea @ wc + bc, axis=1), ls(fea @ wd + bd, axis=1)


def init_params(key):
    ks = jax.random.split(key, 8)
    scale = 0.05
    # PyTorch-convention (out, in) weights, transposed to (in, out) for the kernel.
    wf = (scale * jax.random.normal(ks[0], (HIDDEN, FREQ), jnp.float32)).T
    wt = (scale * jax.random.normal(ks[1], (HIDDEN, TIME), jnp.float32)).T
    wr = (scale * jax.random.normal(ks[2], (HIDDEN, REST), jnp.float32)).T
    bb = scale * jax.random.normal(ks[3], (1, HIDDEN), jnp.float32)
    wc = (scale * jax.random.normal(ks[4], (NCLASS, HIDDEN), jnp.float32)).T
    bc = scale * jax.random.normal(ks[5], (1, NCLASS), jnp.float32)
    wd = (scale * jax.random.normal(ks[6], (NCLASS, HIDDEN), jnp.float32)).T
    bd = scale * jax.random.normal(ks[7], (1, NCLASS), jnp.float32)
    return (wf, wt, wr, bb, wc, bc, wd, bd)


if __name__ == "__main__":
    key = jax.random.PRNGKey(0)
    k_src, k_tgt, k_par = jax.random.split(key, 3)

    B = 16
    source_data = jax.random.normal(k_src, (B, D_TOTAL), jnp.float32)
    target_data = jax.random.normal(k_tgt, (B, D_TOTAL), jnp.float32)
    params = init_params(k_par)

    # Fuse/pad the weights ONCE (outside the per-step jitted forward).
    wb, bbp, wh = fuse_params(params)
    wb, bbp, wh = jax.block_until_ready((wb, bbp, wh))

    outs = danet_forward(source_data, target_data, wb, bbp, wh)
    outs = jax.block_until_ready(outs)
    s_feat, t_feat, s_clf, t_clf, s_out, t_out = outs

    # Correctness check against plain-JAX reference.
    rs_fea, rs_clf, rs_out = _reference(source_data, params)
    rt_fea, rt_clf, rt_out = _reference(target_data, params)
    for got, ref in [(s_feat, rs_fea), (t_feat, rt_fea),
                     (s_clf, rs_clf), (t_clf, rt_clf),
                     (s_out, rs_out), (t_out, rt_out)]:
        assert got.shape == ref.shape
        assert jnp.allclose(got, ref, atol=1e-4, rtol=1e-4)

    print("KERNEL_OK")
</pallas_src>

<mosaic_0001>
module attributes {stable_mosaic.version = 11 : i64} {
  func.func @danet_kernel(%arg0: i32, %arg1: memref<16x400xf32, #tpu.memory_space<vmem>>, %arg2: memref<16x400xf32, #tpu.memory_space<vmem>>, %arg3: memref<400x128xf32, #tpu.memory_space<vmem>>, %arg4: memref<1x128xf32, #tpu.memory_space<vmem>>, %arg5: memref<128x128xf32, #tpu.memory_space<vmem>>, %arg6: memref<32x128xf32, #tpu.memory_space<vmem>>) attributes {dimension_semantics = [#tpu.dimension_semantics<arbitrary>], iteration_bounds = array<i64: 1>, scalar_prefetch = 0 : i64, scratch_operands = 0 : i64, tpu.core_type = #tpu.core_type<tc>, window_params = [{pipeline_mode = #tpu.pipeline_mode<synchronous>, transform_indices = @transform_0, window_bounds = array<i64: 16, 400>}, {pipeline_mode = #tpu.pipeline_mode<synchronous>, transform_indices = @transform_1, window_bounds = array<i64: 16, 400>}, {pipeline_mode = #tpu.pipeline_mode<synchronous>, transform_indices = @transform_2, window_bounds = array<i64: 400, 128>}, {pipeline_mode = #tpu.pipeline_mode<synchronous>, transform_indices = @transform_3, window_bounds = array<i64: 1, 128>}, {pipeline_mode = #tpu.pipeline_mode<synchronous>, transform_indices = @transform_4, window_bounds = array<i64: 128, 128>}, {pipeline_mode = #tpu.pipeline_mode<synchronous>, transform_indices = @transform_5, window_bounds = array<i64: 32, 128>}]} {
    %c0 = arith.constant 0 : index
    %c0_0 = arith.constant 0 : index
    %0 = vector.load %arg3[%c0, %c0_0] : memref<400x128xf32, #tpu.memory_space<vmem>>, vector<400x128xf32>
    %c0_1 = arith.constant 0 : index
    %c0_2 = arith.constant 0 : index
    %1 = vector.load %arg4[%c0_1, %c0_2] : memref<1x128xf32, #tpu.memory_space<vmem>>, vector<1x128xf32>
    %c0_3 = arith.constant 0 : index
    %c0_4 = arith.constant 0 : index
    %2 = vector.load %arg5[%c0_3, %c0_4] : memref<128x128xf32, #tpu.memory_space<vmem>>, vector<128x128xf32>
    %c0_5 = arith.constant 0 : index
    %c0_6 = arith.constant 0 : index
    %3 = vector.load %arg1[%c0_5, %c0_6] : memref<16x400xf32, #tpu.memory_space<vmem>>, vector<16x400xf32>
    %cst = arith.constant dense<0.000000e+00> : vector<16x128xf32>
    %4 = tpu.matmul %3, %0, %cst {dimension_numbers = #tpu.dot_dimension_numbers<[1], [0], [0], [1], [0, 0, 1, 1], [], []>} : vector<16x400xf32>, vector<400x128xf32>, vector<16x128xf32> -> vector<16x128xf32>
    %5 = vector.broadcast %1 : vector<1x128xf32> to vector<16x128xf32>
    %6 = arith.addf %4, %5 : vector<16x128xf32>
    %cst_7 = arith.constant 0.000000e+00 : f32
    %7 = vector.broadcast %cst_7 : f32 to vector<16x128xf32>
    %8 = arith.maximumf %6, %7 : vector<16x128xf32>
    %9 = tpu.iota {dimensions = array<i32: 1>} : vector<16x128xi32>
    %c64_i32 = arith.constant 64 : i32
    %10 = vector.broadcast %c64_i32 : i32 to vector<16x128xi32>
    %11 = arith.cmpi eq, %9, %10 : vector<16x128xi32>
    %cst_8 = arith.constant 1.000000e+00 : f32
    %12 = vector.broadcast %cst_8 : f32 to vector<16x128xf32>
    %13 = arith.select %11, %12, %8 : vector<16x128xi1>, vector<16x128xf32>
    %cst_9 = arith.constant dense<0.000000e+00> : vector<16x128xf32>
    %14 = tpu.matmul %13, %2, %cst_9 {dimension_numbers = #tpu.dot_dimension_numbers<[1], [0], [0], [1], [0, 0, 1, 1], [], []>} : vector<16x128xf32>, vector<128x128xf32>, vector<16x128xf32> -> vector<16x128xf32>
    %cst_10 = arith.constant 0.000000e+00 : f32
    %15 = vector.broadcast %cst_10 : f32 to vector<16x128xf32>
    %16 = arith.minimumf %14, %15 : vector<16x128xf32>
    %17 = math.absf %14 : vector<16x128xf32>
    %cst_11 = arith.constant 0.000000e+00 : f32
    %18 = vector.broadcast %cst_11 : f32 to vector<16x128xf32>
    %19 = arith.subf %18, %17 : vector<16x128xf32>
    %20 = math.exp %19 : vector<16x128xf32>
    %21 = math.log1p %20 : vector<16x128xf32>
    %22 = arith.subf %16, %21 : vector<16x128xf32>
    %c64_i32_12 = arith.constant 64 : i32
    %23 = vector.broadcast %c64_i32_12 : i32 to vector<16x128xi32>
    %24 = arith.cmpi slt, %9, %23 : vector<16x128xi32>
    %25 = arith.select %24, %8, %22 : vector<16x128xi1>, vector<16x128xf32>
    %c0_13 = arith.constant 0 : index
    %c0_14 = arith.constant 0 : index
    %26 = vector.load %arg6[%c0_13, %c0_14] : memref<32x128xf32, #tpu.memory_space<vmem>>, vector<16x128xf32>
    tpu.vector_store %arg6[%c0_13, %c0_14], %25 {strides = array<i32>} : memref<32x128xf32, #tpu.memory_space<vmem>>, vector<16x128xf32>,
    %c0_15 = arith.constant 0 : index
    %c0_16 = arith.constant 0 : index
    %27 = vector.load %arg2[%c0_15, %c0_16] : memref<16x400xf32, #tpu.memory_space<vmem>>, vector<16x400xf32>
    %cst_17 = arith.constant dense<0.000000e+00> : vector<16x128xf32>
    %28 = tpu.matmul %27, %0, %cst_17 {dimension_numbers = #tpu.dot_dimension_numbers<[1], [0], [0], [1], [0, 0, 1, 1], [], []>} : vector<16x400xf32>, vector<400x128xf32>, vector<16x128xf32> -> vector<16x128xf32>
    %29 = vector.broadcast %1 : vector<1x128xf32> to vector<16x128xf32>
    %30 = arith.addf %28, %29 : vector<16x128xf32>
    %cst_18 = arith.constant 0.000000e+00 : f32
    %31 = vector.broadcast %cst_18 : f32 to vector<16x128xf32>
    %32 = arith.maximumf %30, %31 : vector<16x128xf32>
    %33 = tpu.iota {dimensions = array<i32: 1>} : vector<16x128xi32>
    %c64_i32_19 = arith.constant 64 : i32
    %34 = vector.broadcast %c64_i32_19 : i32 to vector<16x128xi32>
    %35 = arith.cmpi eq, %33, %34 : vector<16x128xi32>
    %cst_20 = arith.constant 1.000000e+00 : f32
    %36 = vector.broadcast %cst_20 : f32 to vector<16x128xf32>
    %37 = arith.select %35, %36, %32 : vector<16x128xi1>, vector<16x128xf32>
    %cst_21 = arith.constant dense<0.000000e+00> : vector<16x128xf32>
    %38 = tpu.matmul %37, %2, %cst_21 {dimension_numbers = #tpu.dot_dimension_numbers<[1], [0], [0], [1], [0, 0, 1, 1], [], []>} : vector<16x128xf32>, vector<128x128xf32>, vector<16x128xf32> -> vector<16x128xf32>
    %cst_22 = arith.constant 0.000000e+00 : f32
    %39 = vector.broadcast %cst_22 : f32 to vector<16x128xf32>
    %40 = arith.minimumf %38, %39 : vector<16x128xf32>
    %41 = math.absf %38 : vector<16x128xf32>
    %cst_23 = arith.constant 0.000000e+00 : f32
    %42 = vector.broadcast %cst_23 : f32 to vector<16x128xf32>
    %43 = arith.subf %42, %41 : vector<16x128xf32>
    %44 = math.exp %43 : vector<16x128xf32>
    %45 = math.log1p %44 : vector<16x128xf32>
    %46 = arith.subf %40, %45 : vector<16x128xf32>
    %c64_i32_24 = arith.constant 64 : i32
    %47 = vector.broadcast %c64_i32_24 : i32 to vector<16x128xi32>
    %48 = arith.cmpi slt, %33, %47 : vector<16x128xi32>
    %49 = arith.select %48, %32, %46 : vector<16x128xi1>, vector<16x128xf32>
    %c16 = arith.constant 16 : index
    %c0_25 = arith.constant 0 : index
    %50 = vector.load %arg6[%c16, %c0_25] : memref<32x128xf32, #tpu.memory_space<vmem>>, vector<16x128xf32>
    tpu.vector_store %arg6[%c16, %c0_25], %49 {strides = array<i32>} : memref<32x128xf32, #tpu.memory_space<vmem>>, vector<16x128xf32>,
    return
  }
  func.func @transform_0(%arg0: i32) -> (i32, i32) {
    %c0_i32 = arith.constant 0 : i32
    %c0_i32_0 = arith.constant 0 : i32
    %c0_i32_1 = arith.constant 0 : i32
    return %c0_i32, %c0_i32_0 : i32, i32
  }
  func.func @transform_1(%arg0: i32) -> (i32, i32) {
    %c0_i32 = arith.constant 0 : i32
    %c0_i32_0 = arith.constant 0 : i32
    %c0_i32_1 = arith.constant 0 : i32
    return %c0_i32, %c0_i32_0 : i32, i32
  }
  func.func @transform_2(%arg0: i32) -> (i32, i32) {
    %c0_i32 = arith.constant 0 : i32
    %c0_i32_0 = arith.constant 0 : i32
    %c0_i32_1 = arith.constant 0 : i32
    return %c0_i32, %c0_i32_0 : i32, i32
  }
  func.func @transform_3(%arg0: i32) -> (i32, i32) {
    %c0_i32 = arith.constant 0 : i32
    %c0_i32_0 = arith.constant 0 : i32
    %c0_i32_1 = arith.constant 0 : i32
    return %c0_i32, %c0_i32_0 : i32, i32
  }
  func.func @transform_4(%arg0: i32) -> (i32, i32) {
    %c0_i32 = arith.constant 0 : i32
    %c0_i32_0 = arith.constant 0 : i32
    %c0_i32_1 = arith.constant 0 : i32
    return %c0_i32, %c0_i32_0 : i32, i32
  }
  func.func @transform_5(%arg0: i32) -> (i32, i32) {
    %c0_i32 = arith.constant 0 : i32
    %c0_i32_0 = arith.constant 0 : i32
    %c0_i32_1 = arith.constant 0 : i32
    return %c0_i32, %c0_i32_0 : i32, i32
  }
}

</mosaic_0001>

<llo_original>
// kernel: danet_forward.1
$region0: #{danet_forward.1}
  #allocation0 [shape = 'u32[]', space=smem, size = 0x4, offset = 0x4, fixed_abs, tag = 'smem constant byte address 0x4 - core index']
  #allocation1 [shape = 'u32[144,128]{1,0:T(1,128)}', space=vmem, size = 0x12000, scoped, tag = 'internal scratch']
  %s0 = inlined_call_operand.hbm [shape: f32[16,400], index: 0, kind: input, shape index: {}]
  %s1 = inlined_call_operand.hbm [shape: f32[16,400], index: 1, kind: input, shape index: {}]
  %s2 = inlined_call_operand.hbm [shape: f32[400,128], index: 2, kind: input, shape index: {}]
  %s3 = inlined_call_operand.vmem [shape: f32[1,128], index: 3, kind: input, shape index: {}]
  %s4 = inlined_call_operand.hbm [shape: f32[128,128], index: 4, kind: input, shape index: {}]
  %s5 = inlined_call_operand.vmem [shape: f32[32,128], index: 5, kind: output, shape index: {}]
  %s6 = sld [smem:[#allocation0]]
  $region46: #{danet_forward.1} parent=0
    _
  %s8 = ssub.s32 1, %s6
  %s9 = scalar_select 0, %s8, %s6
  $region1: #{danet_forward.1} parent=0
    #allocation2 [shape = 'u8[32768]{0}', space=vmem, size = 0x8000, scoped, tag = 'input window, operand 0, single buffered']
    #allocation3 [shape = 's32[1]{0}', space=sflag, size = 0x4, scoped, tag = 'scoped memory for danet_forward.1']
    #allocation4 [shape = 'u8[32768]{0}', space=vmem, size = 0x8000, scoped, tag = 'input window, operand 1, single buffered']
    #allocation5 [shape = 's32[1]{0}', space=sflag, size = 0x4, scoped, tag = 'scoped memory for danet_forward.1']
    #allocation6 [shape = 'u8[204800]{0}', space=vmem, size = 0x32000, scoped, tag = 'input window, operand 2, single buffered']
    #allocation7 [shape = 'u8[65536]{0}', space=vmem, size = 0x10000, scoped, tag = 'input window, operand 4, single buffered']
    #allocation8 [shape = 's32[1]{0}', space=sflag, size = 0x4, scoped, tag = 'scoped memory for danet_forward.1']
    %10 = vsyncpa [#allocation3], 0
    %11 = vsyncpa [#allocation5], 0
    %12 = vsyncpa [#allocation8], 0
    // Predicated region
    $region2: #{danet_forward.1} parent=1 // pred_check
      _
    $region3: #{danet_forward.1} parent=1 // pred_check_branch
      %14 = sbr.rel (0) target = $region5
    $region4: #{danet_forward.1} parent=1 // pred_region
      %s16 = ssub.s32 1024, 1024
      %17 = vsyncadd [#allocation3], %s16
      %s18 = sshll.u32 [#allocation2], 4
      %s19 = int_to_ptr.vmem [resolvable:$true] %s18
      %24 = dma.hbm_to_vmem [thread:$0]  %s0, 1024, %s19, [#allocation3], 512, 512, 32
    $region5: #{danet_forward.1} parent=1 // pred_fallthru
      _
    // Predicated region
    $region6: #{danet_forward.1} parent=1 // pred_check
      _
    $region7: #{danet_forward.1} parent=1 // pred_check_branch
      %26 = sbr.rel (0) target = $region9
    $region8: #{danet_forward.1} parent=1 // pred_region
      %s28 = ssub.s32 1024, 1024
      %29 = vsyncadd [#allocation5], %s28
      %s30 = sshll.u32 [#allocation4], 4
      %s31 = int_to_ptr.vmem [resolvable:$true] %s30
      %36 = dma.hbm_to_vmem [thread:$0]  %s1, 1024, %s31, [#allocation5], 512, 512, 32
    $region9: #{danet_forward.1} parent=1 // pred_fallthru
      _
    // Predicated region
    $region10: #{danet_forward.1} parent=1 // pred_check
      _
    $region11: #{danet_forward.1} parent=1 // pred_check_branch
      %38 = sbr.rel (0) target = $region13
    $region12: #{danet_forward.1} parent=1 // pred_region
      %s40 = ssub.s32 6400, 6400
      %41 = vsyncadd [#allocation5], %s40
      %s42 = sshll.u32 [#allocation6], 4
      %s43 = int_to_ptr.vmem [resolvable:$true] %s42
      %48 = dma.hbm_to_vmem [thread:$0]  %s2, 6400, %s43, [#allocation5], 128, 128, 8
    $region13: #{danet_forward.1} parent=1 // pred_fallthru
      _
    // Predicated region
    $region14: #{danet_forward.1} parent=1 // pred_check
      _
    $region15: #{danet_forward.1} parent=1 // pred_check_branch
      %50 = sbr.rel (0) target = $region17
    $region16: #{danet_forward.1} parent=1 // pred_region
      _
    $region17: #{danet_forward.1} parent=1 // pred_fallthru
      _
    // Predicated region
    $region18: #{danet_forward.1} parent=1 // pred_check
      _
    $region19: #{danet_forward.1} parent=1 // pred_check_branch
      %52 = sbr.rel (0) target = $region21
    $region20: #{danet_forward.1} parent=1 // pred_region
      %s54 = ssub.s32 2048, 2048
      %55 = vsyncadd [#allocation8], %s54
      %s56 = sshll.u32 [#allocation7], 4
      %s57 = int_to_ptr.vmem [resolvable:$true] %s56
      %62 = dma.hbm_to_vmem [thread:$0]  %s4, 2048, %s57, [#allocation8], 128, 128, 8
    $region21: #{danet_forward.1} parent=1 // pred_fallthru
      _
    // Predicated region
    $region22: #{danet_forward.1} parent=1 // pred_check
      _
    $region23: #{danet_forward.1} parent=1 // pred_check_branch
      %64 = sbr.rel (0) target = $region25
    $region24: #{danet_forward.1} parent=1 // pred_region
      %65 = dma.done [#allocation3], 1024
    $region25: #{danet_forward.1} parent=1 // pred_fallthru
      _
    // Predicated region
    $region26: #{danet_forward.1} parent=1 // pred_check
      _
    $region27: #{danet_forward.1} parent=1 // pred_check_branch
      %67 = sbr.rel (0) target = $region29
    $region28: #{danet_forward.1} parent=1 // pred_region
      %68 = dma.done [#allocation5], 1024
    $region29: #{danet_forward.1} parent=1 // pred_fallthru
      _
    // Predicated region
    $region30: #{danet_forward.1} parent=1 // pred_check
      _
    $region31: #{danet_forward.1} parent=1 // pred_check_branch
      %70 = sbr.rel (0) target = $region33
    $region32: #{danet_forward.1} parent=1 // pred_region
      %71 = dma.done [#allocation5], 6400
    $region33: #{danet_forward.1} parent=1 // pred_fallthru
      _
    // Predicated region
    $region34: #{danet_forward.1} parent=1 // pred_check
      _
    $region35: #{danet_forward.1} parent=1 // pred_check_branch
      %73 = sbr.rel (0) target = $region37
    $region36: #{danet_forward.1} parent=1 // pred_region
      %74 = dma.done [#allocation8], 2048
    $region37: #{danet_forward.1} parent=1 // pred_fallthru
      _
    %v75 = vld [vmem:[#allocation6] sm:$0xff]
    %v76 = vld [vmem:[#allocation6 + $0x8] sm:$0xff]
    %v77 = vld [vmem:[#allocation6 + $0x10] sm:$0xff]
    %v78 = vld [vmem:[#allocation6 + $0x18] sm:$0xff]
    %v79 = vld [vmem:[#allocation6 + $0x20] sm:$0xff]
    %v80 = vld [vmem:[#allocation6 + $0x28] sm:$0xff]
    %v81 = vld [vmem:[#allocation6 + $0x30] sm:$0xff]
    %v82 = vld [vmem:[#allocation6 + $0x38] sm:$0xff]
    %v83 = vld [vmem:[#allocation6 + $0x40] sm:$0xff]
    %v84 = vld [vmem:[#allocation6 + $0x48] sm:$0xff]
    %v85 = vld [vmem:[#allocation6 + $0x50] sm:$0xff]
    %v86 = vld [vmem:[#allocation6 + $0x58] sm:$0xff]
    %v87 = vld [vmem:[#allocation6 + $0x60] sm:$0xff]
    %v88 = vld [vmem:[#allocation6 + $0x68] sm:$0xff]
    %v89 = vld [vmem:[#allocation6 + $0x70] sm:$0xff]
    %v90 = vld [vmem:[#allocation6 + $0x78] sm:$0xff]
    %v91 = vld [vmem:[#allocation6 + $0x80] sm:$0xff]
    %v92 = vld [vmem:[#allocation6 + $0x88] sm:$0xff]
    %v93 = vld [vmem:[#allocation6 + $0x90] sm:$0xff]
    %v94 = vld [vmem:[#allocation6 + $0x98] sm:$0xff]
    %v95 = vld [vmem:[#allocation6 + $0xa0] sm:$0xff]
    %v96 = vld [vmem:[#allocation6 + $0xa8] sm:$0xff]
    %v97 = vld [vmem:[#allocation6 + $0xb0] sm:$0xff]
    %v98 = vld [vmem:[#allocation6 + $0xb8] sm:$0xff]
    %v99 = vld [vmem:[#allocation6 + $0xc0] sm:$0xff]
    %v100 = vld [vmem:[#allocation6 + $0xc8] sm:$0xff]
    %v101 = vld [vmem:[#allocation6 + $0xd0] sm:$0xff]
    %v102 = vld [vmem:[#allocation6 + $0xd8] sm:$0xff]
    %v103 = vld [vmem:[#allocation6 + $0xe0] sm:$0xff]
    %v104 = vld [vmem:[#allocation6 + $0xe8] sm:$0xff]
    %v105 = vld [vmem:[#allocation6 + $0xf0] sm:$0xff]
    %v106 = vld [vmem:[#allocation6 + $0xf8] sm:$0xff]
    %v107 = vld [vmem:[#allocation6 + $0x100] sm:$0xff]
    %v108 = vld [vmem:[#allocation6 + $0x108] sm:$0xff]
    %v109 = vld [vmem:[#allocation6 + $0x110] sm:$0xff]
    %v110 = vld [vmem:[#allocation6 + $0x118] sm:$0xff]
    %v111 = vld [vmem:[#allocation6 + $0x120] sm:$0xff]
    %v112 = vld [vmem:[#allocation6 + $0x128] sm:$0xff]
    %v113 = vld [vmem:[#allocation6 + $0x130] sm:$0xff]
    %v114 = vld [vmem:[#allocation6 + $0x138] sm:$0xff]
    %v115 = vld [vmem:[#allocation6 + $0x140] sm:$0xff]
    %v116 = vld [vmem:[#allocation6 + $0x148] sm:$0xff]
    %v117 = vld [vmem:[#allocation6 + $0x150] sm:$0xff]
    %v118 = vld [vmem:[#allocation6 + $0x158] sm:$0xff]
    %v119 = vld [vmem:[#allocation6 + $0x160] sm:$0xff]
    %v120 = vld [vmem:[#allocation6 + $0x168] sm:$0xff]
    %v121 = vld [vmem:[#allocation6 + $0x170] sm:$0xff]
    %v122 = vld [vmem:[#allocation6 + $0x178] sm:$0xff]
    %v123 = vld [vmem:[#allocation6 + $0x180] sm:$0xff]
    %v124 = vld [vmem:[#allocation6 + $0x188] sm:$0xff]
    %v125 = vld [vmem:[%s3] sm:$0x1]
    %v126 = vld [vmem:[#allocation7] sm:$0xff]
    %v127 = vld [vmem:[#allocation7 + $0x8] sm:$0xff]
    %v128 = vld [vmem:[#allocation7 + $0x10] sm:$0xff]
    %v129 = vld [vmem:[#allocation7 + $0x18] sm:$0xff]
    %v130 = vld [vmem:[#allocation7 + $0x20] sm:$0xff]
    %v131 = vld [vmem:[#allocation7 + $0x28] sm:$0xff]
    %v132 = vld [vmem:[#allocation7 + $0x30] sm:$0xff]
    %v133 = vld [vmem:[#allocation7 + $0x38] sm:$0xff]
    %v134 = vld [vmem:[#allocation7 + $0x40] sm:$0xff]
    %v135 = vld [vmem:[#allocation7 + $0x48] sm:$0xff]
    %v136 = vld [vmem:[#allocation7 + $0x50] sm:$0xff]
    %v137 = vld [vmem:[#allocation7 + $0x58] sm:$0xff]
    %v138 = vld [vmem:[#allocation7 + $0x60] sm:$0xff]
    %v139 = vld [vmem:[#allocation7 + $0x68] sm:$0xff]
    %v140 = vld [vmem:[#allocation7 + $0x70] sm:$0xff]
    %v141 = vld [vmem:[#allocation7 + $0x78] sm:$0xff]
    %v142 = vld [vmem:[#allocation2] sm:$0xff]
    %v143 = vld [vmem:[#allocation2 + $0x8] sm:$0xff]
    %v144 = vld [vmem:[#allocation2 + $0x10] sm:$0xff]
    %v145 = vld [vmem:[#allocation2 + $0x18] sm:$0xff]
    %v146 = vld [vmem:[#allocation2 + $0x20] sm:$0xff]
    %v147 = vld [vmem:[#allocation2 + $0x28] sm:$0xff]
    %v148 = vld [vmem:[#allocation2 + $0x30] sm:$0xff]
    %v149 = vld [vmem:[#allocation2 + $0x38] sm:$0xff]
    %v151 = vlaneseq
    %v152 = vshrl.u32 %v151, 7
    %v153 = vsub.s32 0, %v152
    %v154 = vrot.slane %v125, %v153
    %vm156 = vcmask 130048
    %v158 = vsel %vm156, %v145, 0
    %v161 = vsel %vm156, %v149, 0
    %163 = vmatprep.subr.mxu0 0.0
    %164 = vmatpush1.msra.mxu0 %v75
    %165 = vmatprep.subr.mxu0 0.0
    %166 = vmatpush1.msra.mxu0 %v76
    %167 = vmatprep.subr.mxu0 0.0
    %168 = vmatpush1.msra.mxu0 %v77
    %169 = vmatprep.subr.mxu0 0.0
    %170 = vmatpush1.msra.mxu0 %v78
    %171 = vmatprep.subr.mxu0 0.0
    %172 = vmatpush1.msra.mxu0 %v79
    %173 = vmatprep.subr.mxu0 0.0
    %174 = vmatpush1.msra.mxu0 %v80
    %175 = vmatprep.subr.mxu0 0.0
    %176 = vmatpush1.msra.mxu0 %v81
    %177 = vmatprep.subr.mxu0 0.0
    %178 = vmatpush1.msra.mxu0 %v82
    %179 = vmatprep.subr.mxu0 0.0
    %180 = vmatpush1.msra.mxu0 %v83
    %181 = vmatprep.subr.mxu0 0.0
    %182 = vmatpush1.msra.mxu0 %v84
    %183 = vmatprep.subr.mxu0 0.0
    %184 = vmatpush1.msra.mxu0 %v85
    %185 = vmatprep.subr.mxu0 0.0
    %186 = vmatpush1.msra.mxu0 %v86
    %187 = vmatprep.subr.mxu0 0.0
    %188 = vmatpush1.msra.mxu0 %v87
    %189 = vmatprep.subr.mxu0 0.0
    %190 = vmatpush1.msra.mxu0 %v88
    %191 = vmatprep.subr.mxu0 0.0
    %192 = vmatpush1.msra.mxu0 %v89
    %193 = vmatprep.subr.mxu0 0.0
    %194 = vmatpush1.msra.mxu0 %v90
    %195 = vmatprep.subr.mxu0 0.0
    %196 = vmatpush1.msra.mxu0 %v91
    %197 = vmatprep.subr.mxu0 0.0
    %198 = vmatpush1.msra.mxu0 %v92
    %199 = vmatprep.subr.mxu0 0.0
    %200 = vmatpush1.msra.mxu0 %v93
    %201 = vmatprep.subr.mxu0 0.0
    %202 = vmatpush1.msra.mxu0 %v94
    %203 = vmatprep.subr.mxu0 0.0
    %204 = vmatpush1.msra.mxu0 %v95
    %205 = vmatprep.subr.mxu0 0.0
    %206 = vmatpush1.msra.mxu0 %v96
    %207 = vmatprep.subr.mxu0 0.0
    %208 = vmatpush1.msra.mxu0 %v97
    %209 = vmatprep.subr.mxu0 0.0
    %210 = vmatpush1.msra.mxu0 %v98
    %211 = vmatprep.subr.mxu0 0.0
    %212 = vmatpush1.msra.mxu0 %v99
    %213 = vmatprep.subr.mxu0 0.0
    %214 = vmatpush1.msra.mxu0 %v100
    %215 = vmatprep.subr.mxu0 0.0
    %216 = vmatpush1.msra.mxu0 %v101
    %217 = vmatprep.subr.mxu0 0.0
    %218 = vmatpush1.msra.mxu0 %v102
    %219 = vmatprep.subr.mxu0 0.0
    %220 = vmatpush1.msra.mxu0 %v103
    %221 = vmatprep.subr.mxu0 0.0
    %222 = vmatpush1.msra.mxu0 %v104
    %223 = vmatprep.subr.mxu0 0.0
    %224 = vmatpush1.msra.mxu0 %v105
    %225 = vmatprep.subr.mxu0 0.0
    %226 = vmatpush1.msra.mxu0 %v106
    %227 = vmatprep.mubr.f32.mxu0 %v143
    %228 = vmatmul.mubr.f32.gmra.mrb[0].mxu0 %v142
    %v229 = vpop.f32.mrb[0].mxu0
    %v230 = vadd.f32 %v154, %v229
    %v231 = vpop.f32.mrb[0].mxu0
    %232 = vmatprep.mubr.f32.mxu0 %v147
    %233 = vmatmul.mubr.f32.gmra.mrb[0].mxu0 %v146
    %v234 = vpop.f32.mrb[0].mxu0
    %v235 = vadd.f32 %v154, %v234
    %v236 = vpop.f32.mrb[0].mxu0
    %237 = vdwg.mxu0
    %238 = vmatprep.subr.mxu0 0.0
    %239 = vmatpush1.msra.mxu0 %v107
    %240 = vmatprep.subr.mxu0 0.0
    %241 = vmatpush1.msra.mxu0 %v108
    %242 = vmatprep.subr.mxu0 0.0
    %243 = vmatpush1.msra.mxu0 %v109
    %244 = vmatprep.subr.mxu0 0.0
    %245 = vmatpush1.msra.mxu0 %v110
    %246 = vmatprep.subr.mxu0 0.0
    %247 = vmatpush1.msra.mxu0 %v111
    %248 = vmatprep.subr.mxu0 0.0
    %249 = vmatpush1.msra.mxu0 %v112
    %250 = vmatprep.subr.mxu0 0.0
    %251 = vmatpush1.msra.mxu0 %v113
    %252 = vmatprep.subr.mxu0 0.0
    %253 = vmatpush1.msra.mxu0 %v114
    %254 = vmatprep.subr.mxu0 0.0
    %255 = vmatpush1.msra.mxu0 %v115
    %256 = vmatprep.subr.mxu0 0.0
    %257 = vmatpush1.msra.mxu0 %v116
    %258 = vmatprep.subr.mxu0 0.0
    %259 = vmatpush1.msra.mxu0 %v117
    %260 = vmatprep.subr.mxu0 0.0
    %261 = vmatpush1.msra.mxu0 %v118
    %262 = vmatprep.subr.mxu0 0.0
    %263 = vmatpush1.msra.mxu0 %v119
    %264 = vmatprep.subr.mxu0 0.0
    %265 = vmatpush1.msra.mxu0 %v120
    %266 = vmatprep.subr.mxu0 0.0
    %267 = vmatpush1.msra.mxu0 %v121
    %268 = vmatprep.subr.mxu0 0.0
    %269 = vmatpush1.msra.mxu0 %v122
    %270 = vmatprep.subr.mxu0 0.0
    %271 = vmatpush1.msra.mxu0 %v123
    %272 = vmatprep.subr.mxu0 0.0
    %273 = vmatpush1.msra.mxu0 %v124
    %274 = vmatprep.subr.mxu0 0.0
    %275 = vmatpush1.msra.mxu0 0.0
    %276 = vmatprep.subr.mxu0 0.0
    %277 = vmatpush1.msra.mxu0 0.0
    %278 = vmatprep.subr.mxu0 0.0
    %279 = vmatpush1.msra.mxu0 0.0
    %280 = vmatprep.subr.mxu0 0.0
    %281 = vmatpush1.msra.mxu0 0.0
    %282 = vmatprep.subr.mxu0 0.0
    %283 = vmatpush1.msra.mxu0 0.0
    %284 = vmatprep.subr.mxu0 0.0
    %285 = vmatpush1.msra.mxu0 0.0
    %286 = vmatprep.subr.mxu0 0.0
    %287 = vmatpush1.msra.mxu0 0.0
    %288 = vmatprep.subr.mxu0 0.0
    %289 = vmatpush1.msra.mxu0 0.0
    %290 = vmatprep.subr.mxu0 0.0
    %291 = vmatpush1.msra.mxu0 0.0
    %292 = vmatprep.subr.mxu0 0.0
    %293 = vmatpush1.msra.mxu0 0.0
    %294 = vmatprep.subr.mxu0 0.0
    %295 = vmatpush1.msra.mxu0 0.0
    %296 = vmatprep.subr.mxu0 0.0
    %297 = vmatpush1.msra.mxu0 0.0
    %298 = vmatprep.subr.mxu0 0.0
    %299 = vmatpush1.msra.mxu0 0.0
    %300 = vmatprep.subr.mxu0 0.0
    %301 = vmatpush1.msra.mxu0 0.0
    %302 = vmatprep.mubr.f32.mxu0 %v158
    %303 = vmatmul.mubr.f32.gmra.mrb[0].mxu0 %v144
    %v304 = vpop.f32.mrb[0].mxu0
    %v305 = vadd.f32 %v230, %v304
    %v306 = vpop.f32.mrb[0].mxu0
    %307 = vmatprep.mubr.f32.mxu0 %v161
    %308 = vmatmul.mubr.f32.gmra.mrb[0].mxu0 %v148
    %v309 = vpop.f32.mrb[0].mxu0
    %v310 = vadd.f32 %v235, %v309
    %v311 = vpop.f32.mrb[0].mxu0
    %312 = vdwg.mxu0
    %v313 = vmax.f32 %v305, 0.0
    %v314 = vmax.f32 %v310, 0.0
    %v315 = vlaneseq
    %v316 = vand.u32 %v315, 127
    %vm317 = vcmp.eq.s32.totalorder %v316, 64
    %v318 = vsel %vm317, 1.0, %v313
    %v319 = vsel %vm317, 1.0, %v314
    %320 = vmatprep.subr.mxu0 0.0
    %321 = vmatpush1.msra.mxu0 %v126
    %322 = vmatprep.subr.mxu0 0.0
    %323 = vmatpush1.msra.mxu0 %v127
    %324 = vmatprep.subr.mxu0 0.0
    %325 = vmatpush1.msra.mxu0 %v128
    %326 = vmatprep.subr.mxu0 0.0
    %327 = vmatpush1.msra.mxu0 %v129
    %328 = vmatprep.subr.mxu0 0.0
    %329 = vmatpush1.msra.mxu0 %v130
    %330 = vmatprep.subr.mxu0 0.0
    %331 = vmatpush1.msra.mxu0 %v131
    %332 = vmatprep.subr.mxu0 0.0
    %333 = vmatpush1.msra.mxu0 %v132
    %334 = vmatprep.subr.mxu0 0.0
    %335 = vmatpush1.msra.mxu0 %v133
    %336 = vmatprep.subr.mxu0 0.0
    %337 = vmatpush1.msra.mxu0 %v134
    %338 = vmatprep.subr.mxu0 0.0
    %339 = vmatpush1.msra.mxu0 %v135
    %340 = vmatprep.subr.mxu0 0.0
    %341 = vmatpush1.msra.mxu0 %v136
    %342 = vmatprep.subr.mxu0 0.0
    %343 = vmatpush1.msra.mxu0 %v137
    %344 = vmatprep.subr.mxu0 0.0
    %345 = vmatpush1.msra.mxu0 %v138
    %346 = vmatprep.subr.mxu0 0.0
    %347 = vmatpush1.msra.mxu0 %v139
    %348 = vmatprep.subr.mxu0 0.0
    %349 = vmatpush1.msra.mxu0 %v140
    %350 = vmatprep.subr.mxu0 0.0
    %351 = vmatpush1.msra.mxu0 %v141
    %352 = vmatprep.subr.mxu0 0.0
    %353 = vmatpush1.msra.mxu0 0.0
    %354 = vmatprep.subr.mxu0 0.0
    %355 = vmatpush1.msra.mxu0 0.0
    %356 = vmatprep.subr.mxu0 0.0
    %357 = vmatpush1.msra.mxu0 0.0
    %358 = vmatprep.subr.mxu0 0.0
    %359 = vmatpush1.msra.mxu0 0.0
    %360 = vmatprep.subr.mxu0 0.0
    %361 = vmatpush1.msra.mxu0 0.0
    %362 = vmatprep.subr.mxu0 0.0
    %363 = vmatpush1.msra.mxu0 0.0
    %364 = vmatprep.subr.mxu0 0.0
    %365 = vmatpush1.msra.mxu0 0.0
    %366 = vmatprep.subr.mxu0 0.0
    %367 = vmatpush1.msra.mxu0 0.0
    %368 = vmatprep.subr.mxu0 0.0
    %369 = vmatpush1.msra.mxu0 0.0
    %370 = vmatprep.subr.mxu0 0.0
    %371 = vmatpush1.msra.mxu0 0.0
    %372 = vmatprep.subr.mxu0 0.0
    %373 = vmatpush1.msra.mxu0 0.0
    %374 = vmatprep.subr.mxu0 0.0
    %375 = vmatpush1.msra.mxu0 0.0
    %376 = vmatprep.subr.mxu0 0.0
    %377 = vmatpush1.msra.mxu0 0.0
    %378 = vmatprep.subr.mxu0 0.0
    %379 = vmatpush1.msra.mxu0 0.0
    %380 = vmatprep.subr.mxu0 0.0
    %381 = vmatpush1.msra.mxu0 0.0
    %382 = vmatprep.subr.mxu0 0.0
    %383 = vmatpush1.msra.mxu0 0.0
    %384 = vmatprep.mubr.f32.mxu0 0.0
    %385 = vmatmul.mubr.f32.gmra.mrb[0].mxu0 %v318
    %v386 = vpop.f32.mrb[0].mxu0
    %v387 = vadd.f32 0.0, %v386
    %v388 = vpop.f32.mrb[0].mxu0
    %389 = vmatprep.mubr.f32.mxu0 0.0
    %390 = vmatmul.mubr.f32.gmra.mrb[0].mxu0 %v319
    %v391 = vpop.f32.mrb[0].mxu0
    %v392 = vadd.f32 0.0, %v391
    %v393 = vpop.f32.mrb[0].mxu0
    %394 = vdwg.mxu0
    %v395 = vmin.f32 %v387, 0.0
    %v396 = vmin.f32 %v392, 0.0
    %v397 = vand.u32 2147483647, %v387
    %v398 = vand.u32 2147483647, %v392
    %v399 = vsub.f32 0.0, %v397
    %v400 = vsub.f32 0.0, %v398
    %v401 = vmul.f32 %v399, 1.442695
    %v402 = vpow.pop %v401
    %v403 = vmul.f32 %v400, 1.442695
    %v404 = vpow.pop %v403
    %v405 = vadd.f32 %v402, 1.0
    %v406 = vlog2.pop %v405
    %v407 = vmul.f32 %v406, 0.6931472
    %v408 = vmul.f32 -0.5, %v402
    %v409 = vadd.f32 %v408, 1.0
    %v410 = vmul.f32 %v409, %v402
    %v411 = vand.u32 2147483647, %v402
    %vm412 = vcmp.lt.f32.partialorder %v411, 0.0004427343
    %v413 = vsel %vm412, %v410, %v407
    %v414 = vadd.f32 %v404, 1.0
    %v415 = vlog2.pop %v414
    %v416 = vmul.f32 %v415, 0.6931472
    %v417 = vmul.f32 -0.5, %v404
    %v418 = vadd.f32 %v417, 1.0
    %v419 = vmul.f32 %v418, %v404
    %v420 = vand.u32 2147483647, %v404
    %vm421 = vcmp.lt.f32.partialorder %v420, 0.0004427343
    %v422 = vsel %vm421, %v419, %v416
    %v423 = vsub.f32 %v395, %v413
    %v424 = vsub.f32 %v396, %v422
    %vm425 = vcmp.lt.s32.totalorder %v316, 64
    %v426 = vsel %vm425, %v313, %v423
    %v427 = vsel %vm425, %v314, %v424
    %428 = vst [vmem:[%s5] sm:$0xff] %v426
    %429 = vst [vmem:[%s5 + $0x8] sm:$0xff] %v427
    %v430 = vld [vmem:[#allocation4] sm:$0xff]
    %v431 = vld [vmem:[#allocation4 + $0x8] sm:$0xff]
    %v432 = vld [vmem:[#allocation4 + $0x10] sm:$0xff]
    %v433 = vld [vmem:[#allocation4 + $0x18] sm:$0xff]
    %v434 = vld [vmem:[#allocation4 + $0x20] sm:$0xff]
    %v435 = vld [vmem:[#allocation4 + $0x28] sm:$0xff]
    %v436 = vld [vmem:[#allocation4 + $0x30] sm:$0xff]
    %v437 = vld [vmem:[#allocation4 + $0x38] sm:$0xff]
    %v439 = vsel %vm156, %v433, 0
    %v442 = vsel %vm156, %v437, 0
    %444 = vmatprep.subr.mxu0 0.0
    %445 = vmatpush1.msra.mxu0 %v75
    %446 = vmatprep.subr.mxu0 0.0
    %447 = vmatpush1.msra.mxu0 %v76
    %448 = vmatprep.subr.mxu0 0.0
    %449 = vmatpush1.msra.mxu0 %v77
    %450 = vmatprep.subr.mxu0 0.0
    %451 = vmatpush1.msra.mxu0 %v78
    %452 = vmatprep.subr.mxu0 0.0
    %453 = vmatpush1.msra.mxu0 %v79
    %454 = vmatprep.subr.mxu0 0.0
    %455 = vmatpush1.msra.mxu0 %v80
    %456 = vmatprep.subr.mxu0 0.0
    %457 = vmatpush1.msra.mxu0 %v81
    %458 = vmatprep.subr.mxu0 0.0
    %459 = vmatpush1.msra.mxu0 %v82
    %460 = vmatprep.subr.mxu0 0.0
    %461 = vmatpush1.msra.mxu0 %v83
    %462 = vmatprep.subr.mxu0 0.0
    %463 = vmatpush1.msra.mxu0 %v84
    %464 = vmatprep.subr.mxu0 0.0
    %465 = vmatpush1.msra.mxu0 %v85
    %466 = vmatprep.subr.mxu0 0.0
    %467 = vmatpush1.msra.mxu0 %v86
    %468 = vmatprep.subr.mxu0 0.0
    %469 = vmatpush1.msra.mxu0 %v87
    %470 = vmatprep.subr.mxu0 0.0
    %471 = vmatpush1.msra.mxu0 %v88
    %472 = vmatprep.subr.mxu0 0.0
    %473 = vmatpush1.msra.mxu0 %v89
    %474 = vmatprep.subr.mxu0 0.0
    %475 = vmatpush1.msra.mxu0 %v90
    %476 = vmatprep.subr.mxu0 0.0
    %477 = vmatpush1.msra.mxu0 %v91
    %478 = vmatprep.subr.mxu0 0.0
    %479 = vmatpush1.msra.mxu0 %v92
    %480 = vmatprep.subr.mxu0 0.0
    %481 = vmatpush1.msra.mxu0 %v93
    %482 = vmatprep.subr.mxu0 0.0
    %483 = vmatpush1.msra.mxu0 %v94
    %484 = vmatprep.subr.mxu0 0.0
    %485 = vmatpush1.msra.mxu0 %v95
    %486 = vmatprep.subr.mxu0 0.0
    %487 = vmatpush1.msra.mxu0 %v96
    %488 = vmatprep.subr.mxu0 0.0
    %489 = vmatpush1.msra.mxu0 %v97
    %490 = vmatprep.subr.mxu0 0.0
    %491 = vmatpush1.msra.mxu0 %v98
    %492 = vmatprep.subr.mxu0 0.0
    %493 = vmatpush1.msra.mxu0 %v99
    %494 = vmatprep.subr.mxu0 0.0
    %495 = vmatpush1.msra.mxu0 %v100
    %496 = vmatprep.subr.mxu0 0.0
    %497 = vmatpush1.msra.mxu0 %v101
    %498 = vmatprep.subr.mxu0 0.0
    %499 = vmatpush1.msra.mxu0 %v102
    %500 = vmatprep.subr.mxu0 0.0
    %501 = vmatpush1.msra.mxu0 %v103
    %502 = vmatprep.subr.mxu0 0.0
    %503 = vmatpush1.msra.mxu0 %v104
    %504 = vmatprep.subr.mxu0 0.0
    %505 = vmatpush1.msra.mxu0 %v105
    %506 = vmatprep.subr.mxu0 0.0
    %507 = vmatpush1.msra.mxu0 %v106
    %508 = vmatprep.mubr.f32.mxu0 %v431
    %509 = vmatmul.mubr.f32.gmra.mrb[0].mxu0 %v430
    %v510 = vpop.f32.mrb[0].mxu0
    %v511 = vadd.f32 %v154, %v510
    %v512 = vpop.f32.mrb[0].mxu0
    %513 = vmatprep.mubr.f32.mxu0 %v435
    %514 = vmatmul.mubr.f32.gmra.mrb[0].mxu0 %v434
    %v515 = vpop.f32.mrb[0].mxu0
    %v516 = vadd.f32 %v154, %v515
    %v517 = vpop.f32.mrb[0].mxu0
    %518 = vdwg.mxu0
    %519 = vmatprep.subr.mxu0 0.0
    %520 = vmatpush1.msra.mxu0 %v107
    %521 = vmatprep.subr.mxu0 0.0
    %522 = vmatpush1.msra.mxu0 %v108
    %523 = vmatprep.subr.mxu0 0.0
    %524 = vmatpush1.msra.mxu0 %v109
    %525 = vmatprep.subr.mxu0 0.0
    %526 = vmatpush1.msra.mxu0 %v110
    %527 = vmatprep.subr.mxu0 0.0
    %528 = vmatpush1.msra.mxu0 %v111
    %529 = vmatprep.subr.mxu0 0.0
    %530 = vmatpush1.msra.mxu0 %v112
    %531 = vmatprep.subr.mxu0 0.0
    %532 = vmatpush1.msra.mxu0 %v113
    %533 = vmatprep.subr.mxu0 0.0
    %534 = vmatpush1.msra.mxu0 %v114
    %535 = vmatprep.subr.mxu0 0.0
    %536 = vmatpush1.msra.mxu0 %v115
    %537 = vmatprep.subr.mxu0 0.0
    %538 = vmatpush1.msra.mxu0 %v116
    %539 = vmatprep.subr.mxu0 0.0
    %540 = vmatpush1.msra.mxu0 %v117
    %541 = vmatprep.subr.mxu0 0.0
    %542 = vmatpush1.msra.mxu0 %v118
    %543 = vmatprep.subr.mxu0 0.0
    %544 = vmatpush1.msra.mxu0 %v119
    %545 = vmatprep.subr.mxu0 0.0
    %546 = vmatpush1.msra.mxu0 %v120
    %547 = vmatprep.subr.mxu0 0.0
    %548 = vmatpush1.msra.mxu0 %v121
    %549 = vmatprep.subr.mxu0 0.0
    %550 = vmatpush1.msra.mxu0 %v122
    %551 = vmatprep.subr.mxu0 0.0
    %552 = vmatpush1.msra.mxu0 %v123
    %553 = vmatprep.subr.mxu0 0.0
    %554 = vmatpush1.msra.mxu0 %v124
    %555 = vmatprep.subr.mxu0 0.0
    %556 = vmatpush1.msra.mxu0 0.0
    %557 = vmatprep.subr.mxu0 0.0
    %558 = vmatpush1.msra.mxu0 0.0
    %559 = vmatprep.subr.mxu0 0.0
    %560 = vmatpush1.msra.mxu0 0.0
    %561 = vmatprep.subr.mxu0 0.0
    %562 = vmatpush1.msra.mxu0 0.0
    %563 = vmatprep.subr.mxu0 0.0
    %564 = vmatpush1.msra.mxu0 0.0
    %565 = vmatprep.subr.mxu0 0.0
    %566 = vmatpush1.msra.mxu0 0.0
    %567 = vmatprep.subr.mxu0 0.0
    %568 = vmatpush1.msra.mxu0 0.0
    %569 = vmatprep.subr.mxu0 0.0
    %570 = vmatpush1.msra.mxu0 0.0
    %571 = vmatprep.subr.mxu0 0.0
    %572 = vmatpush1.msra.mxu0 0.0
    %573 = vmatprep.subr.mxu0 0.0
    %574 = vmatpush1.msra.mxu0 0.0
    %575 = vmatprep.subr.mxu0 0.0
    %576 = vmatpush1.msra.mxu0 0.0
    %577 = vmatprep.subr.mxu0 0.0
    %578 = vmatpush1.msra.mxu0 0.0
    %579 = vmatprep.subr.mxu0 0.0
    %580 = vmatpush1.msra.mxu0 0.0
    %581 = vmatprep.subr.mxu0 0.0
    %582 = vmatpush1.msra.mxu0 0.0
    %583 = vmatprep.mubr.f32.mxu0 %v439
    %584 = vmatmul.mubr.f32.gmra.mrb[0].mxu0 %v432
    %v585 = vpop.f32.mrb[0].mxu0
    %v586 = vadd.f32 %v511, %v585
    %v587 = vpop.f32.mrb[0].mxu0
    %588 = vmatprep.mubr.f32.mxu0 %v442
    %589 = vmatmul.mubr.f32.gmra.mrb[0].mxu0 %v436
    %v590 = vpop.f32.mrb[0].mxu0
    %v591 = vadd.f32 %v516, %v590
    %v592 = vpop.f32.mrb[0].mxu0
    %593 = vdwg.mxu0
    %v594 = vmax.f32 %v586, 0.0
    %v595 = vmax.f32 %v591, 0.0
    %v596 = vsel %vm317, 1.0, %v594
    %v597 = vsel %vm317, 1.0, %v595
    %598 = vmatprep.subr.mxu0 0.0
    %599 = vmatpush1.msra.mxu0 %v126
    %600 = vmatprep.subr.mxu0 0.0
    %601 = vmatpush1.msra.mxu0 %v127
    %602 = vmatprep.subr.mxu0 0.0
    %603 = vmatpush1.msra.mxu0 %v128
    %604 = vmatprep.subr.mxu0 0.0
    %605 = vmatpush1.msra.mxu0 %v129
    %606 = vmatprep.subr.mxu0 0.0
    %607 = vmatpush1.msra.mxu0 %v130
    %608 = vmatprep.subr.mxu0 0.0
    %609 = vmatpush1.msra.mxu0 %v131
    %610 = vmatprep.subr.mxu0 0.0
    %611 = vmatpush1.msra.mxu0 %v132
    %612 = vmatprep.subr.mxu0 0.0
    %613 = vmatpush1.msra.mxu0 %v133
    %614 = vmatprep.subr.mxu0 0.0
    %615 = vmatpush1.msra.mxu0 %v134
    %616 = vmatprep.subr.mxu0 0.0
    %617 = vmatpush1.msra.mxu0 %v135
    %618 = vmatprep.subr.mxu0 0.0
    %619 = vmatpush1.msra.mxu0 %v136
    %620 = vmatprep.subr.mxu0 0.0
    %621 = vmatpush1.msra.mxu0 %v137
    %622 = vmatprep.subr.mxu0 0.0
    %623 = vmatpush1.msra.mxu0 %v138
    %624 = vmatprep.subr.mxu0 0.0
    %625 = vmatpush1.msra.mxu0 %v139
    %626 = vmatprep.subr.mxu0 0.0
    %627 = vmatpush1.msra.mxu0 %v140
    %628 = vmatprep.subr.mxu0 0.0
    %629 = vmatpush1.msra.mxu0 %v141
    %630 = vmatprep.subr.mxu0 0.0
    %631 = vmatpush1.msra.mxu0 0.0
    %632 = vmatprep.subr.mxu0 0.0
    %633 = vmatpush1.msra.mxu0 0.0
    %634 = vmatprep.subr.mxu0 0.0
    %635 = vmatpush1.msra.mxu0 0.0
    %636 = vmatprep.subr.mxu0 0.0
    %637 = vmatpush1.msra.mxu0 0.0
    %638 = vmatprep.subr.mxu0 0.0
    %639 = vmatpush1.msra.mxu0 0.0
    %640 = vmatprep.subr.mxu0 0.0
    %641 = vmatpush1.msra.mxu0 0.0
    %642 = vmatprep.subr.mxu0 0.0
    %643 = vmatpush1.msra.mxu0 0.0
    %644 = vmatprep.subr.mxu0 0.0
    %645 = vmatpush1.msra.mxu0 0.0
    %646 = vmatprep.subr.mxu0 0.0
    %647 = vmatpush1.msra.mxu0 0.0
    %648 = vmatprep.subr.mxu0 0.0
    %649 = vmatpush1.msra.mxu0 0.0
    %650 = vmatprep.subr.mxu0 0.0
    %651 = vmatpush1.msra.mxu0 0.0
    %652 = vmatprep.subr.mxu0 0.0
    %653 = vmatpush1.msra.mxu0 0.0
    %654 = vmatprep.subr.mxu0 0.0
    %655 = vmatpush1.msra.mxu0 0.0
    %656 = vmatprep.subr.mxu0 0.0
    %657 = vmatpush1.msra.mxu0 0.0
    %658 = vmatprep.subr.mxu0 0.0
    %659 = vmatpush1.msra.mxu0 0.0
    %660 = vmatprep.subr.mxu0 0.0
    %661 = vmatpush1.msra.mxu0 0.0
    %662 = vmatprep.mubr.f32.mxu0 0.0
    %663 = vmatmul.mubr.f32.gmra.mrb[0].mxu0 %v596
    %v664 = vpop.f32.mrb[0].mxu0
    %v665 = vadd.f32 0.0, %v664
    %v666 = vpop.f32.mrb[0].mxu0
    %667 = vmatprep.mubr.f32.mxu0 0.0
    %668 = vmatmul.mubr.f32.gmra.mrb[0].mxu0 %v597
    %v669 = vpop.f32.mrb[0].mxu0
    %v670 = vadd.f32 0.0, %v669
    %v671 = vpop.f32.mrb[0].mxu0
    %672 = vdwg.mxu0
    %v673 = vmin.f32 %v665, 0.0
    %v674 = vmin.f32 %v670, 0.0
    %v675 = vand.u32 2147483647, %v665
    %v676 = vand.u32 2147483647, %v670
    %v677 = vsub.f32 0.0, %v675
    %v678 = vsub.f32 0.0, %v676
    %v679 = vmul.f32 %v677, 1.442695
    %v680 = vpow.pop %v679
    %v681 = vmul.f32 %v678, 1.442695
    %v682 = vpow.pop %v681
    %v683 = vadd.f32 %v680, 1.0
    %v684 = vlog2.pop %v683
    %v685 = vmul.f32 %v684, 0.6931472
    %v686 = vmul.f32 -0.5, %v680
    %v687 = vadd.f32 %v686, 1.0
    %v688 = vmul.f32 %v687, %v680
    %v689 = vand.u32 2147483647, %v680
    %vm690 = vcmp.lt.f32.partialorder %v689, 0.0004427343
    %v691 = vsel %vm690, %v688, %v685
    %v692 = vadd.f32 %v682, 1.0
    %v693 = vlog2.pop %v692
    %v694 = vmul.f32 %v693, 0.6931472
    %v695 = vmul.f32 -0.5, %v682
    %v696 = vadd.f32 %v695, 1.0
    %v697 = vmul.f32 %v696, %v682
    %v698 = vand.u32 2147483647, %v682
    %vm699 = vcmp.lt.f32.partialorder %v698, 0.0004427343
    %v700 = vsel %vm699, %v697, %v694
    %v701 = vsub.f32 %v673, %v691
    %v702 = vsub.f32 %v674, %v700
    %v703 = vsel %vm425, %v594, %v701
    %v704 = vsel %vm425, %v595, %v702
    %705 = vst [vmem:[%s5 + $0x10] sm:$0xff] %v703
    %706 = vst [vmem:[%s5 + $0x18] sm:$0xff] %v704
    // Predicated region
    $region38: #{danet_forward.1} parent=1 // pred_check
      _
    $region39: #{danet_forward.1} parent=1 // pred_check_branch
      %708 = sbr.rel (0) target = $region41
    $region40: #{danet_forward.1} parent=1 // pred_region
      _
    $region41: #{danet_forward.1} parent=1 // pred_fallthru
      _
    // Predicated region
    $region42: #{danet_forward.1} parent=1 // pred_check
      _
    $region43: #{danet_forward.1} parent=1 // pred_check_branch
      %710 = sbr.rel (0) target = $region45
    $region44: #{danet_forward.1} parent=1 // pred_region
      _
    $region45: #{danet_forward.1} parent=1 // pred_fallthru
      _
    %711 = vsyncpa [#allocation3], 1
    %712 = vsyncpa [#allocation5], 1
    %713 = vsyncpa [#allocation8], 1

</llo_original>
